<compile_context>
chip_gen: v5e
topology: v5e:2x2
jax: 0.10.0
libtpu: 0.0.40
codegen_flags: <defaults>
</compile_context>

<pallas_src>
import functools

import jax
import jax.numpy as jnp
from jax.experimental import pallas as pl
from jax.experimental.pallas import tpu as pltpu

NUM_CLASSES = 13
_LANES = 128
_DEFAULT_TILE_N = 32768  # rows per grid step; class-major tile ~ few MiB dbl-buffered
_TINY_N = 128            # below this, pallas_call overhead dominates -> use XLA


def _round_up(x, m):
    return (x + m - 1) // m * m


def _class_weight_ce_kernel(x_ref, tgt_ref, w_ref, out_ref, *, n_rows, tile_n):
    """Class-major tile: x/w are (13, tile_n), tgt is (1, tile_n)."""
    i = pl.program_id(0)

    x = x_ref[...].astype(jnp.float32)      # (13, tile_n) logits
    w = w_ref[...].astype(jnp.float32)      # (13, tile_n) class weights
    tgt = tgt_ref[...]                      # (1, tile_n)  int32 labels

    # Per-column (per-sample) softmax stats: 13-sublane reductions, lane-dense.
    m = jnp.max(x, axis=0, keepdims=True)                           # (1, tile_n)
    lse = jnp.log(jnp.sum(jnp.exp(x - m), axis=0, keepdims=True))   # (1, tile_n)

    # Fused picked-class math: one select + one sublane reduce.
    #   loss[col] = w[tgt[col], col] * (m + lse - x[tgt[col], col])
    cls = jax.lax.broadcasted_iota(jnp.int32, x.shape, 0)           # (13, tile_n)
    onehot = cls == tgt                                             # sublane bcast
    loss = jnp.sum(jnp.where(onehot, w * ((m + lse) - x), 0.0),
                   axis=0, keepdims=True)                           # (1, tile_n)

    if n_rows % tile_n == 0:
        # No ragged tile exists: every grid step stores an unmasked partial sum.
        out_ref[...] = jnp.zeros((1, 1, _LANES), jnp.float32) + jnp.sum(loss)
    else:
        last = pl.num_programs(0) - 1

        @pl.when(i != last)
        def _():
            out_ref[...] = jnp.zeros((1, 1, _LANES), jnp.float32) + jnp.sum(loss)

        @pl.when(i == last)
        def _():
            # Only the ragged last tile pays for masking; select (not multiply)
            # so garbage columns that produced inf/NaN cannot poison the sum.
            col = jax.lax.broadcasted_iota(jnp.int32, loss.shape, 1) + i * tile_n
            masked = jnp.where(col < n_rows, loss, 0.0)
            out_ref[...] = jnp.zeros((1, 1, _LANES), jnp.float32) + jnp.sum(masked)


def _xla_class_weight_ce(inputs, target, class_weights):
    """Fused-XLA reference / tiny-batch fast path."""
    logsm = jax.nn.log_softmax(inputs.astype(jnp.float32), axis=1)
    y = jax.nn.one_hot(target, NUM_CLASSES, dtype=jnp.float32)
    return jnp.sum(class_weights.astype(jnp.float32) * (-(y * logsm)))


def class_weight_ce(inputs, target, class_weights, *, tile_n=_DEFAULT_TILE_N):
    """inputs: (N, 13) f32/bf16 logits; target: (N,) int; class_weights: (N, 13)."""
    n, c = inputs.shape
    assert c == NUM_CLASSES

    if n <= _TINY_N:
        # Dominated by kernel-launch/grid overhead; let XLA fuse it.
        return _xla_class_weight_ce(inputs, target, class_weights)

    # Class-major layout: N on the 128-lane axis, 13 classes on sublanes.
    # One XLA transpose here is far cheaper than running ~90%-idle vregs.
    x_cm = inputs.T                                   # (13, N)
    w_cm = class_weights.T                            # (13, N)
    tgt_row = target.reshape(1, n).astype(jnp.int32)  # (1, N)

    tile_n = _round_up(max(_LANES, min(tile_n, _round_up(n, _LANES))), _LANES)
    num_tiles = pl.cdiv(n, tile_n)

    kernel = functools.partial(_class_weight_ce_kernel, n_rows=n, tile_n=tile_n)
    partials = pl.pallas_call(
        kernel,
        out_shape=jax.ShapeDtypeStruct((num_tiles, 1, _LANES), jnp.float32),
        grid=(num_tiles,),
        in_specs=[
            pl.BlockSpec((NUM_CLASSES, tile_n), lambda i: (0, i)),  # logits (13, N)
            pl.BlockSpec((1, tile_n), lambda i: (0, i)),            # targets (1, N)
            pl.BlockSpec((NUM_CLASSES, tile_n), lambda i: (0, i)),  # weights (13, N)
        ],
        out_specs=pl.BlockSpec((1, 1, _LANES), lambda i: (i, 0, 0)),
        compiler_params=pltpu.CompilerParams(
            dimension_semantics=("parallel",),      # shards tiles on v7x's 2 TCs
            vmem_limit_bytes=48 * 1024 * 1024,      # safe on v7x's 64 MiB VMEM
        ),
    )(x_cm, tgt_row, w_cm)

    # Cheap final reduction over the lane-dense per-tile partial sums.
    return jnp.sum(partials[:, 0, 0])


if __name__ == "__main__":
    key = jax.random.PRNGKey(0)
    k1, k2, k3, k4, k5, k6 = jax.random.split(key, 6)

    # Shared f32 data: N=2500 samples, 13 classes.
    n1 = 2500
    x1 = jax.random.normal(k1, (n1, NUM_CLASSES), dtype=jnp.float32)
    t1 = jax.random.randint(k2, (n1,), 0, NUM_CLASSES, dtype=jnp.int32)
    w1 = jax.random.uniform(k3, (n1, NUM_CLASSES), dtype=jnp.float32,
                            minval=0.5, maxval=1.5)
    ref1 = _xla_class_weight_ce(x1, t1, w1)

    # Case 1: multi-tile grid with a ragged last tile (f32).
    out1 = jax.block_until_ready(class_weight_ce(x1, t1, w1, tile_n=512))
    assert jnp.allclose(out1, ref1, rtol=1e-4, atol=1e-2), (out1, ref1)

    # Case 2: default tile size -> single (ragged) lane-dense block.
    out1b = jax.block_until_ready(class_weight_ce(x1, t1, w1))
    assert jnp.allclose(out1b, ref1, rtol=1e-4, atol=1e-2), (out1b, ref1)

    # Case 3: bf16 inputs (halves HBM traffic; kernel upcasts to f32 internally).
    n2 = 523
    x2 = jax.random.normal(k4, (n2, NUM_CLASSES), dtype=jnp.float32).astype(jnp.bfloat16)
    t2 = jax.random.randint(k5, (n2,), 0, NUM_CLASSES, dtype=jnp.int32)
    w2 = jax.random.uniform(k6, (n2, NUM_CLASSES), dtype=jnp.float32,
                            minval=0.5, maxval=1.5).astype(jnp.bfloat16)
    out2 = jax.block_until_ready(class_weight_ce(x2, t2, w2, tile_n=256))
    ref2 = _xla_class_weight_ce(x2, t2, w2)
    assert jnp.allclose(out2, ref2, rtol=1e-3, atol=1e-1), (out2, ref2)

    # Case 4: tiny batch -> fused-XLA fast path.
    n3 = 8
    x3 = jax.random.normal(k1, (n3, NUM_CLASSES), dtype=jnp.float32)
    t3 = jax.random.randint(k2, (n3,), 0, NUM_CLASSES, dtype=jnp.int32)
    w3 = jax.random.uniform(k3, (n3, NUM_CLASSES), dtype=jnp.float32,
                            minval=0.5, maxval=1.5)
    out3 = jax.block_until_ready(class_weight_ce(x3, t3, w3))
    ref3 = _xla_class_weight_ce(x3, t3, w3)
    assert jnp.allclose(out3, ref3, rtol=1e-5, atol=1e-5), (out3, ref3)

    print("KERNEL_OK")
</pallas_src>

<mosaic_0001>
module attributes {stable_mosaic.version = 11 : i64} {
  func.func @_class_weight_ce_kernel(%arg0: i32, %arg1: memref<13x512xf32, #tpu.memory_space<vmem>>, %arg2: memref<1x512xi32, #tpu.memory_space<vmem>>, %arg3: memref<13x512xf32, #tpu.memory_space<vmem>>, %arg4: memref<1x1x128xf32, #tpu.memory_space<vmem>>) attributes {dimension_semantics = [#tpu.dimension_semantics<parallel>], iteration_bounds = array<i64: 5>, scalar_prefetch = 0 : i64, scratch_operands = 0 : i64, tpu.core_type = #tpu.core_type<tc>, window_params = [{transform_indices = @transform_0, window_bounds = array<i64: 13, 512>}, {transform_indices = @transform_1, window_bounds = array<i64: 1, 512>}, {transform_indices = @transform_2, window_bounds = array<i64: 13, 512>}, {transform_indices = @transform_3, window_bounds = array<i64: 1, 1, 128>}]} {
    %c0 = arith.constant 0 : index
    %c0_0 = arith.constant 0 : index
    %0 = vector.load %arg1[%c0, %c0_0] : memref<13x512xf32, #tpu.memory_space<vmem>>, vector<13x512xf32>
    %c0_1 = arith.constant 0 : index
    %c0_2 = arith.constant 0 : index
    %1 = vector.load %arg3[%c0_1, %c0_2] : memref<13x512xf32, #tpu.memory_space<vmem>>, vector<13x512xf32>
    %c0_3 = arith.constant 0 : index
    %c0_4 = arith.constant 0 : index
    %2 = vector.load %arg2[%c0_3, %c0_4] : memref<1x512xi32, #tpu.memory_space<vmem>>, vector<1x512xi32>
    %cst = arith.constant dense<0xFF800000> : vector<512xf32>
    %3 = vector.multi_reduction <maximumf>, %0, %cst [0] : vector<13x512xf32> to vector<512xf32>
    %4 = vector.shape_cast %3 : vector<512xf32> to vector<1x512xf32>
    %5 = vector.broadcast %4 : vector<1x512xf32> to vector<13x512xf32>
    %6 = arith.subf %0, %5 : vector<13x512xf32>
    %7 = math.exp %6 : vector<13x512xf32>
    %cst_5 = arith.constant dense<0.000000e+00> : vector<512xf32>
    %8 = vector.multi_reduction <add>, %7, %cst_5 [0] : vector<13x512xf32> to vector<512xf32>
    %9 = vector.shape_cast %8 : vector<512xf32> to vector<1x512xf32>
    %10 = math.log %9 : vector<1x512xf32>
    %11 = tpu.iota {dimensions = array<i32: 0>} : vector<13x512xi32>
    %12 = vector.broadcast %2 : vector<1x512xi32> to vector<13x512xi32>
    %13 = arith.cmpi eq, %11, %12 : vector<13x512xi32>
    %14 = arith.addf %4, %10 : vector<1x512xf32>
    %15 = vector.broadcast %14 : vector<1x512xf32> to vector<13x512xf32>
    %16 = arith.subf %15, %0 : vector<13x512xf32>
    %17 = arith.mulf %1, %16 : vector<13x512xf32>
    %cst_6 = arith.constant 0.000000e+00 : f32
    %18 = vector.broadcast %cst_6 : f32 to vector<13x512xf32>
    %19 = arith.select %13, %17, %18 : vector<13x512xi1>, vector<13x512xf32>
    %cst_7 = arith.constant dense<0.000000e+00> : vector<512xf32>
    %20 = vector.multi_reduction <add>, %19, %cst_7 [0] : vector<13x512xf32> to vector<512xf32>
    %21 = vector.shape_cast %20 : vector<512xf32> to vector<1x512xf32>
    %c4_i32 = arith.constant 4 : i32
    %22 = arith.cmpi ne, %arg0, %c4_i32 : i32
    %23 = arith.extui %22 : i1 to i32
    %c0_i32 = arith.constant 0 : i32
    %24 = arith.cmpi ne, %23, %c0_i32 : i32
    scf.if %24 {
      %cst_10 = arith.constant 0.000000e+00 : f32
      %28 = vector.broadcast %cst_10 : f32 to vector<1x1x128xf32>
      %29 = vector.shape_cast %21 : vector<1x512xf32> to vector<1x1x512xf32>
      %cst_11 = arith.constant dense<0.000000e+00> : vector<1xf32>
      %30 = vector.multi_reduction <add>, %29, %cst_11 [1, 2] : vector<1x1x512xf32> to vector<1xf32>
      %31 = vector.shape_cast %30 : vector<1xf32> to vector<1x1x1xf32>
      %32 = vector.extract %31[0, 0, 0] : f32 from vector<1x1x1xf32>
      %33 = vector.broadcast %32 : f32 to vector<1x1x128xf32>
      %34 = arith.addf %28, %33 : vector<1x1x128xf32>
      %c0_12 = arith.constant 0 : index
      %c0_13 = arith.constant 0 : index
      %c0_14 = arith.constant 0 : index
      %35 = vector.load %arg4[%c0_12, %c0_13, %c0_14] : memref<1x1x128xf32, #tpu.memory_space<vmem>>, vector<1x1x128xf32>
      tpu.vector_store %arg4[%c0_12, %c0_13, %c0_14], %34 {strides = array<i32>} : memref<1x1x128xf32, #tpu.memory_space<vmem>>, vector<1x1x128xf32>,
    } else {
    }
    %c4_i32_8 = arith.constant 4 : i32
    %25 = arith.cmpi eq, %arg0, %c4_i32_8 : i32
    %26 = arith.extui %25 : i1 to i32
    %c0_i32_9 = arith.constant 0 : i32
    %27 = arith.cmpi ne, %26, %c0_i32_9 : i32
    scf.if %27 {
      %28 = tpu.iota {dimensions = array<i32: 1>} : vector<1x512xi32>
      %c512_i32 = arith.constant 512 : i32
      %29 = arith.muli %arg0, %c512_i32 : i32
      %30 = vector.broadcast %29 : i32 to vector<1x512xi32>
      %31 = arith.addi %28, %30 : vector<1x512xi32>
      %c2500_i32 = arith.constant 2500 : i32
      %32 = vector.broadcast %c2500_i32 : i32 to vector<1x512xi32>
      %33 = arith.cmpi slt, %31, %32 : vector<1x512xi32>
      %cst_10 = arith.constant 0.000000e+00 : f32
      %34 = vector.broadcast %cst_10 : f32 to vector<1x512xf32>
      %35 = arith.select %33, %21, %34 : vector<1x512xi1>, vector<1x512xf32>
      %cst_11 = arith.constant 0.000000e+00 : f32
      %36 = vector.broadcast %cst_11 : f32 to vector<1x1x128xf32>
      %37 = vector.shape_cast %35 : vector<1x512xf32> to vector<1x1x512xf32>
      %cst_12 = arith.constant dense<0.000000e+00> : vector<1xf32>
      %38 = vector.multi_reduction <add>, %37, %cst_12 [1, 2] : vector<1x1x512xf32> to vector<1xf32>
      %39 = vector.shape_cast %38 : vector<1xf32> to vector<1x1x1xf32>
      %40 = vector.extract %39[0, 0, 0] : f32 from vector<1x1x1xf32>
      %41 = vector.broadcast %40 : f32 to vector<1x1x128xf32>
      %42 = arith.addf %36, %41 : vector<1x1x128xf32>
      %c0_13 = arith.constant 0 : index
      %c0_14 = arith.constant 0 : index
      %c0_15 = arith.constant 0 : index
      %43 = vector.load %arg4[%c0_13, %c0_14, %c0_15] : memref<1x1x128xf32, #tpu.memory_space<vmem>>, vector<1x1x128xf32>
      tpu.vector_store %arg4[%c0_13, %c0_14, %c0_15], %42 {strides = array<i32>} : memref<1x1x128xf32, #tpu.memory_space<vmem>>, vector<1x1x128xf32>,
    } else {
    }
    return
  }
  func.func @transform_0(%arg0: i32) -> (i32, i32) {
    %c0_i32 = arith.constant 0 : i32
    %c0_i32_0 = arith.constant 0 : i32
    return %c0_i32, %arg0 : i32, i32
  }
  func.func @transform_1(%arg0: i32) -> (i32, i32) {
    %c0_i32 = arith.constant 0 : i32
    %c0_i32_0 = arith.constant 0 : i32
    return %c0_i32, %arg0 : i32, i32
  }
  func.func @transform_2(%arg0: i32) -> (i32, i32) {
    %c0_i32 = arith.constant 0 : i32
    %c0_i32_0 = arith.constant 0 : i32
    return %c0_i32, %arg0 : i32, i32
  }
  func.func @transform_3(%arg0: i32) -> (i32, i32, i32) {
    %c0_i32 = arith.constant 0 : i32
    %c0_i32_0 = arith.constant 0 : i32
    %c0_i32_1 = arith.constant 0 : i32
    return %arg0, %c0_i32, %c0_i32_0 : i32, i32, i32
  }
}

</mosaic_0001>

<llo_original>
// kernel: tpu_custom_call.1
$region0: #{tpu_custom_call.1}
  #allocation0 [shape = 'u32[]', space=smem, size = 0x4, offset = 0x4, fixed_abs, tag = 'smem constant byte address 0x4 - core index']
  #allocation1 [shape = 'u32[72,128]{1,0:T(1,128)}', space=vmem, size = 0x9000, scoped, tag = 'internal scratch']
  %s0 = inlined_call_operand.hbm [shape: f32[13,2500], index: 0, kind: input, shape index: {}]
  %s1 = inlined_call_operand.hbm [shape: s32[1,2500], index: 1, kind: input, shape index: {}]
  %s2 = inlined_call_operand.hbm [shape: f32[13,2500], index: 2, kind: input, shape index: {}]
  %s3 = inlined_call_operand.hbm [shape: f32[5,1,128], index: 3, kind: output, shape index: {}]
  %s4 = sld [smem:[#allocation0]]
  $region65: #{tpu_custom_call.1} parent=0
    _
  %s6 = ssub.s32 1, %s4
  %s7 = scalar_select 0, %s6, %s4
  $region1: #{tpu_custom_call.1} parent=0
    #allocation2 [shape = 'u8[65536]{0}', space=vmem, size = 0x10000, scoped, tag = 'input window, operand 0']
    #allocation3 [shape = 's32[2]{0}', space=sflag, size = 0x8, scoped, tag = 'scoped memory for tpu_custom_call.1']
    #allocation4 [shape = 's32[2]{0}', space=sflag, size = 0x8, scoped, tag = 'scoped memory for tpu_custom_call.1']
    #allocation5 [shape = 'u8[4096]{0}', space=vmem, size = 0x1000, scoped, tag = 'input window, operand 1']
    #allocation6 [shape = 's32[2]{0}', space=sflag, size = 0x8, scoped, tag = 'scoped memory for tpu_custom_call.1']
    #allocation7 [shape = 'u8[65536]{0}', space=vmem, size = 0x10000, scoped, tag = 'input window, operand 2']
    #allocation8 [shape = 'u8[1024]{0}', space=vmem, size = 0x400, scoped, tag = 'output window, operand 0']
    %8 = vsyncpa [#allocation3], 0
    %s9 = scalar_lea.sflag [#allocation3], 1
    %10 = vsyncpa %s9, 0
    %11 = vsyncpa [#allocation6], 0
    %s12 = scalar_lea.sflag [#allocation6], 1
    %13 = vsyncpa %s12, 0
    %14 = vsyncpa [#allocation4], 0
    %s15 = scalar_lea.sflag [#allocation4], 1
    %16 = vsyncpa %s15, 0
    loop: start=0, step=1, limit=7
    $region2: #{tpu_custom_call.1} parent=1 // loop_pre_header
      _
    $region3: #{tpu_custom_call.1} parent=1 // loop_header
      %s18 = sphi 0, %s22
      %p19 = scmp.ge.s32.totalorder %s18, 7
      %s28 = sphi 0, %s30
      %s31 = sphi 0, %s28
      %s32 = sphi 0, %s31
      %s48 = sphi 0, %s32
      %s54 = sphi 0, %s56
      %s57 = sphi 0, %s54
      %s58 = sphi 0, %s57
      %s74 = sphi 0, %s58
      %s80 = sphi 0, %s82
      %s83 = sphi 0, %s80
      %s84 = sphi 0, %s83
      %s100 = sphi 0, %s84
      %s106 = sphi 0, %s108
      %s109 = sphi 0, %s106
      %s110 = sphi 0, %s109
      %s126 = sphi 0, %s110
    $region4: #{tpu_custom_call.1} parent=1 // loop_header_branch
      %21 = sbr.rel (%p19) target = $region8
    $region5: #{tpu_custom_call.1} parent=1 // loop_body
      %s23 = ssub.s32 %s18, 1
      %s24 = ssub.s32 %s18, 2
      %s25 = sadd.s32 %s18, 1
      %s26 = ssub.s32 %s18, %s25
      %p27 = scmp.eq.s32.totalorder %s26, 0
      %s29 = sadd.s32 %s28, 1
      %s30 = scalar_select %p27, %s28, %s29
      %p33 = pneg %p27
      %p34 = scmp.eq.s32.totalorder %s18, 4
      %p35 = por %p33, %p34
      %p36 = scmp.ne.s32.totalorder %s28, %s31
      %p37 = scmp.eq.s32.totalorder %s18, 0
      %p38 = por %p36, %p37
      %p39 = scmp.ne.s32.totalorder %s28, %s31
      %p40 = scmp.eq.s32.totalorder %s23, 4
      %p41 = por %p39, %p40
      %p42 = scmp.ne.s32.totalorder %s31, %s32
      %p43 = scmp.eq.s32.totalorder %s23, 0
      %p44 = por %p42, %p43
      %p45 = scmp.ne.s32.totalorder %s31, %s32
      %p46 = scmp.eq.s32.totalorder %s24, 4
      %p47 = por %p45, %p46
      %p49 = scmp.ne.s32.totalorder %s32, %s48
      %p50 = scmp.eq.s32.totalorder %s24, 0
      %p51 = por %p49, %p50
      %s52 = ssub.s32 %s18, %s25
      %p53 = scmp.eq.s32.totalorder %s52, 0
      %s55 = sadd.s32 %s54, 1
      %s56 = scalar_select %p53, %s54, %s55
      %p59 = pneg %p53
      %p60 = scmp.eq.s32.totalorder %s18, 4
      %p61 = por %p59, %p60
      %p62 = scmp.ne.s32.totalorder %s54, %s57
      %p63 = scmp.eq.s32.totalorder %s18, 0
      %p64 = por %p62, %p63
      %p65 = scmp.ne.s32.totalorder %s54, %s57
      %p66 = scmp.eq.s32.totalorder %s23, 4
      %p67 = por %p65, %p66
      %p68 = scmp.ne.s32.totalorder %s57, %s58
      %p69 = scmp.eq.s32.totalorder %s23, 0
      %p70 = por %p68, %p69
      %p71 = scmp.ne.s32.totalorder %s57, %s58
      %p72 = scmp.eq.s32.totalorder %s24, 4
      %p73 = por %p71, %p72
      %p75 = scmp.ne.s32.totalorder %s58, %s74
      %p76 = scmp.eq.s32.totalorder %s24, 0
      %p77 = por %p75, %p76
      %s78 = ssub.s32 %s18, %s25
      %p79 = scmp.eq.s32.totalorder %s78, 0
      %s81 = sadd.s32 %s80, 1
      %s82 = scalar_select %p79, %s80, %s81
      %p85 = pneg %p79
      %p86 = scmp.eq.s32.totalorder %s18, 4
      %p87 = por %p85, %p86
      %p88 = scmp.ne.s32.totalorder %s80, %s83
      %p89 = scmp.eq.s32.totalorder %s18, 0
      %p90 = por %p88, %p89
      %p91 = scmp.ne.s32.totalorder %s80, %s83
      %p92 = scmp.eq.s32.totalorder %s23, 4
      %p93 = por %p91, %p92
      %p94 = scmp.ne.s32.totalorder %s83, %s84
      %p95 = scmp.eq.s32.totalorder %s23, 0
      %p96 = por %p94, %p95
      %p97 = scmp.ne.s32.totalorder %s83, %s84
      %p98 = scmp.eq.s32.totalorder %s24, 4
      %p99 = por %p97, %p98
      %p101 = scmp.ne.s32.totalorder %s84, %s100
      %p102 = scmp.eq.s32.totalorder %s24, 0
      %p103 = por %p101, %p102
      %s104 = ssub.s32 %s18, %s25
      %p105 = scmp.eq.s32.totalorder %s104, 0
      %s107 = sadd.s32 %s106, 1
      %s108 = scalar_select %p105, %s106, %s107
      %p111 = pneg %p105
      %p112 = scmp.eq.s32.totalorder %s18, 4
      %p113 = por %p111, %p112
      %p114 = scmp.ne.s32.totalorder %s106, %s109
      %p115 = scmp.eq.s32.totalorder %s18, 0
      %p116 = por %p114, %p115
      %p117 = scmp.ne.s32.totalorder %s106, %s109
      %p118 = scmp.eq.s32.totalorder %s23, 4
      %p119 = por %p117, %p118
      %p120 = scmp.ne.s32.totalorder %s109, %s110
      %p121 = scmp.eq.s32.totalorder %s23, 0
      %p122 = por %p120, %p121
      %p123 = scmp.ne.s32.totalorder %s109, %s110
      %p124 = scmp.eq.s32.totalorder %s24, 4
      %p125 = por %p123, %p124
      %p127 = scmp.ne.s32.totalorder %s110, %s126
      %p128 = scmp.eq.s32.totalorder %s24, 0
      %p129 = por %p127, %p128
      %p130 = scmp.le.s32.totalorder 1, %s18
      %p131 = scmp.lt.s32.totalorder %s18, 6
      %p132 = pnand %p130, %p131
      %p133 = pneg %p132
      // Predicated region
      $region9: #{tpu_custom_call.1} parent=5 // pred_check
        _
      $region10: #{tpu_custom_call.1} parent=5 // pred_check_branch
        %135 = sbr.rel (%p132) target = $region12
      $region11: #{tpu_custom_call.1} parent=5 // pred_region
        %s136 = ssub.s32 %s18, 1
      $region12: #{tpu_custom_call.1} parent=5 // pred_fallthru
        _
      %p137 = scmp.lt.s32.totalorder %s18, 5
      // Predicated region
      $region13: #{tpu_custom_call.1} parent=5 // pred_check
        %p138 = pneg %p137
      $region14: #{tpu_custom_call.1} parent=5 // pred_check_branch
        %140 = sbr.rel (%p138) target = $region16
      $region15: #{tpu_custom_call.1} parent=5 // pred_region
        // Predicated region
        $region17: #{tpu_custom_call.1} parent=15 // pred_check
          %p141 = pneg %p38
        $region18: #{tpu_custom_call.1} parent=15 // pred_check_branch
          %143 = sbr.rel (%p141) target = $region20
        $region19: #{tpu_custom_call.1} parent=15 // pred_region
          %s144 = sand.u32 %s28, 1
          %s145 = scalar_lea.sflag [#allocation3], %s144
          %s146 = sand.u32 %s28, 1
          %s147 = smul.addr %s146, 64
          %s148 = scalar_lea.vmem [#allocation2], %s147
          %s149 = smul.u32 4, %s18
          %151 = vsyncadd %s145, 0
          %s152 = smul.addr %s149, 8
          %s153 = scalar_lea.hbm %s0, %s152
          %s154 = sshll.u32 %s153, 4
          %s155 = int_to_ptr.hbm [resolvable:$true] %s154
          %s156 = sshll.u32 %s148, 4
          %s157 = int_to_ptr.vmem [resolvable:$true] %s156
          %162 = dma.hbm_to_vmem [thread:$0]  %s155, 1024, %s157, %s145, 2560, 512, 32
        $region20: #{tpu_custom_call.1} parent=15 // pred_fallthru
          _
        // Predicated region
        $region21: #{tpu_custom_call.1} parent=15 // pred_check
          %p163 = pneg %p64
        $region22: #{tpu_custom_call.1} parent=15 // pred_check_branch
          %165 = sbr.rel (%p163) target = $region24
        $region23: #{tpu_custom_call.1} parent=15 // pred_region
          %s166 = sand.u32 %s18, 1
          %s167 = scalar_lea.sflag [#allocation6], %s166
          %s168 = sand.u32 %s54, 1
          %s169 = smul.addr %s168, 4
          %s170 = scalar_lea.vmem [#allocation5], %s169
          %s171 = smul.u32 4, %s18
          %173 = vsyncadd %s167, 0
          %s174 = scalar_lea.hbm %s1, %s171
          %s176 = sshll.u32 %s174, 4
          %s177 = int_to_ptr.hbm [resolvable:$true] %s176
          %s178 = sshll.u32 %s170, 4
          %s179 = int_to_ptr.vmem [resolvable:$true] %s178
          %181 = dma.hbm_to_vmem [thread:$0]  %s177, 64, %s179, %s167
        $region24: #{tpu_custom_call.1} parent=15 // pred_fallthru
          _
        // Predicated region
        $region25: #{tpu_custom_call.1} parent=15 // pred_check
          %p182 = pneg %p90
        $region26: #{tpu_custom_call.1} parent=15 // pred_check_branch
          %184 = sbr.rel (%p182) target = $region28
        $region27: #{tpu_custom_call.1} parent=15 // pred_region
          %s185 = sand.u32 %s18, 1
          %s186 = scalar_lea.sflag [#allocation6], %s185
          %s187 = sand.u32 %s80, 1
          %s188 = smul.addr %s187, 64
          %s189 = scalar_lea.vmem [#allocation7], %s188
          %s190 = smul.u32 4, %s18
          %192 = vsyncadd %s186, 0
          %s193 = smul.addr %s190, 8
          %s194 = scalar_lea.hbm %s2, %s193
          %s195 = sshll.u32 %s194, 4
          %s196 = int_to_ptr.hbm [resolvable:$true] %s195
          %s197 = sshll.u32 %s189, 4
          %s198 = int_to_ptr.vmem [resolvable:$true] %s197
          %203 = dma.hbm_to_vmem [thread:$0]  %s196, 1024, %s198, %s186, 2560, 512, 32
        $region28: #{tpu_custom_call.1} parent=15 // pred_fallthru
          _
      $region16: #{tpu_custom_call.1} parent=5 // pred_fallthru
        _
      %p204 = scmp.le.s32.totalorder 1, %s18
      %p205 = scmp.lt.s32.totalorder %s18, 6
      %p206 = pnand %p204, %p205
      %p207 = pneg %p206
      // Predicated region
      $region29: #{tpu_custom_call.1} parent=5 // pred_check
        _
      $region30: #{tpu_custom_call.1} parent=5 // pred_check_branch
        %209 = sbr.rel (%p206) target = $region32
      $region31: #{tpu_custom_call.1} parent=5 // pred_region
        %s210 = ssub.s32 %s18, 1
        %s211 = sand.u32 %s31, 1
        %s212 = scalar_lea.sflag [#allocation3], %s211
        %s213 = sand.u32 %s31, 1
        %s214 = smul.addr %s213, 64
        %s215 = scalar_lea.vmem [#allocation2], %s214
        // Predicated region
        $region33: #{tpu_custom_call.1} parent=31 // pred_check
          %p216 = pneg %p44
        $region34: #{tpu_custom_call.1} parent=31 // pred_check_branch
          %218 = sbr.rel (%p216) target = $region36
        $region35: #{tpu_custom_call.1} parent=31 // pred_region
          %220 = dma.done %s212, 1024
        $region36: #{tpu_custom_call.1} parent=31 // pred_fallthru
          _
        %s221 = sand.u32 %s23, 1
        %s222 = scalar_lea.sflag [#allocation6], %s221
        %s223 = sand.u32 %s57, 1
        %s224 = smul.addr %s223, 4
        %s225 = scalar_lea.vmem [#allocation5], %s224
        // Predicated region
        $region37: #{tpu_custom_call.1} parent=31 // pred_check
          %p226 = pneg %p70
        $region38: #{tpu_custom_call.1} parent=31 // pred_check_branch
          %228 = sbr.rel (%p226) target = $region40
        $region39: #{tpu_custom_call.1} parent=31 // pred_region
          %230 = dma.done %s222, 64
        $region40: #{tpu_custom_call.1} parent=31 // pred_fallthru
          _
        %s231 = sand.u32 %s23, 1
        %s232 = scalar_lea.sflag [#allocation6], %s231
        %s233 = sand.u32 %s83, 1
        %s234 = smul.addr %s233, 64
        %s235 = scalar_lea.vmem [#allocation7], %s234
        // Predicated region
        $region41: #{tpu_custom_call.1} parent=31 // pred_check
          %p236 = pneg %p96
        $region42: #{tpu_custom_call.1} parent=31 // pred_check_branch
          %238 = sbr.rel (%p236) target = $region44
        $region43: #{tpu_custom_call.1} parent=31 // pred_region
          %240 = dma.done %s232, 1024
        $region44: #{tpu_custom_call.1} parent=31 // pred_fallthru
          _
        %s241 = sand.u32 %s31, 1
        %s242 = scalar_lea.sflag [#allocation3], %s241
        %s243 = sand.u32 %s31, 1
        %s244 = smul.addr %s243, 64
        %s245 = scalar_lea.vmem [#allocation2], %s244
        %p246 = pneg %p44
        %p247 = pneg %p41
        %s248 = sand.u32 %s23, 1
        %s249 = scalar_lea.sflag [#allocation6], %s248
        %s250 = sand.u32 %s57, 1
        %s251 = smul.addr %s250, 4
        %s252 = scalar_lea.vmem [#allocation5], %s251
        %p253 = pneg %p70
        %p254 = pneg %p67
        %s255 = sand.u32 %s23, 1
        %s256 = scalar_lea.sflag [#allocation6], %s255
        %s257 = sand.u32 %s83, 1
        %s258 = smul.addr %s257, 64
        %s259 = scalar_lea.vmem [#allocation7], %s258
        %p260 = pneg %p96
        %p261 = pneg %p93
        %p262 = pneg %p122
        %p263 = pneg %p119
        %s264 = sand.u32 %s109, 1
        %s265 = scalar_lea.sflag [#allocation4], %s264
        %s266 = sand.u32 %s109, 1
        %s267 = scalar_lea.vmem [#allocation8], %s266
        %s268 = smul.u32 4, %s23
        %s269 = smul.u32 4, %s23
        %s270 = smul.u32 4, %s23
        %v271 = vld [vmem:[%s215] sm:$0xff]
        %v272 = vld [vmem:[%s215 + $0x8] sm:$0xff]
        %v273 = vld [vmem:[%s215 + $0x10] sm:$0xff]
        %v274 = vld [vmem:[%s215 + $0x18] sm:$0xff]
        %v275 = vld [vmem:[%s215 + $0x20] sm:$0x1f]
        %v276 = vld [vmem:[%s215 + $0x28] sm:$0x1f]
        %v277 = vld [vmem:[%s215 + $0x30] sm:$0x1f]
        %v278 = vld [vmem:[%s215 + $0x38] sm:$0x1f]
        %v279 = vld [vmem:[%s235] sm:$0xff]
        %v280 = vld [vmem:[%s235 + $0x8] sm:$0xff]
        %v281 = vld [vmem:[%s235 + $0x10] sm:$0xff]
        %v282 = vld [vmem:[%s235 + $0x18] sm:$0xff]
        %v283 = vld [vmem:[%s235 + $0x20] sm:$0x1f]
        %v284 = vld [vmem:[%s235 + $0x28] sm:$0x1f]
        %v285 = vld [vmem:[%s235 + $0x30] sm:$0x1f]
        %v286 = vld [vmem:[%s235 + $0x38] sm:$0x1f]
        %v287 = vld [vmem:[%s225] sm:$0xf]
        %vm288 = vcmask 1044480
        %v289 = vsel %vm288, %v275, -inf
        %v290 = vmax.f32 %v271, %v289
        %v291 = vrot.slane %v290, 4
        %v292 = vmax.f32 %v290, %v291
        %v293 = vrot.slane %v292, 2
        %v294 = vmax.f32 %v292, %v293
        %v295 = vrot.slane %v294, 1
        %v296 = vmax.f32 %v294, %v295
        %v297 = vsel %vm288, %v276, -inf
        %v298 = vmax.f32 %v272, %v297
        %v299 = vrot.slane %v298, 4
        %v300 = vmax.f32 %v298, %v299
        %v301 = vrot.slane %v300, 2
        %v302 = vmax.f32 %v300, %v301
        %v303 = vrot.slane %v302, 1
        %v304 = vmax.f32 %v302, %v303
        %v305 = vsel %vm288, %v277, -inf
        %v306 = vmax.f32 %v273, %v305
        %v307 = vrot.slane %v306, 4
        %v308 = vmax.f32 %v306, %v307
        %v309 = vrot.slane %v308, 2
        %v310 = vmax.f32 %v308, %v309
        %v311 = vrot.slane %v310, 1
        %v312 = vmax.f32 %v310, %v311
        %v313 = vsel %vm288, %v278, -inf
        %v314 = vmax.f32 %v274, %v313
        %v315 = vrot.slane %v314, 4
        %v316 = vmax.f32 %v314, %v315
        %v317 = vrot.slane %v316, 2
        %v318 = vmax.f32 %v316, %v317
        %v319 = vrot.slane %v318, 1
        %v320 = vmax.f32 %v318, %v319
        %v321 = vsub.f32 %v271, %v296
        %v322 = vsub.f32 %v272, %v304
        %v323 = vsub.f32 %v273, %v312
        %v324 = vsub.f32 %v274, %v320
        %v325 = vsub.f32 %v275, %v296
        %v326 = vsub.f32 %v276, %v304
        %v327 = vsub.f32 %v277, %v312
        %v328 = vsub.f32 %v278, %v320
        %v329 = vmul.f32 %v321, 1.442695
        %v330 = vpow.pop %v329
        %v331 = vmul.f32 %v322, 1.442695
        %v332 = vpow.pop %v331
        %v333 = vmul.f32 %v323, 1.442695
        %v334 = vpow.pop %v333
        %v335 = vmul.f32 %v324, 1.442695
        %v336 = vpow.pop %v335
        %v337 = vmul.f32 %v325, 1.442695
        %v338 = vpow.pop %v337
        %v339 = vmul.f32 %v326, 1.442695
        %v340 = vpow.pop %v339
        %v341 = vmul.f32 %v327, 1.442695
        %v342 = vpow.pop %v341
        %v343 = vmul.f32 %v328, 1.442695
        %v344 = vpow.pop %v343
        %v345 = vsel %vm288, %v338, 0.0
        %v346 = vadd.f32 %v330, %v345
        %v347 = vrot.slane %v346, 4
        %v348 = vadd.f32 %v346, %v347
        %v349 = vrot.slane %v348, 2
        %v350 = vadd.f32 %v348, %v349
        %v351 = vrot.slane %v350, 1
        %v352 = vadd.f32 %v350, %v351
        %v353 = vsel %vm288, %v340, 0.0
        %v354 = vadd.f32 %v332, %v353
        %v355 = vrot.slane %v354, 4
        %v356 = vadd.f32 %v354, %v355
        %v357 = vrot.slane %v356, 2
        %v358 = vadd.f32 %v356, %v357
        %v359 = vrot.slane %v358, 1
        %v360 = vadd.f32 %v358, %v359
        %v361 = vsel %vm288, %v342, 0.0
        %v362 = vadd.f32 %v334, %v361
        %v363 = vrot.slane %v362, 4
        %v364 = vadd.f32 %v362, %v363
        %v365 = vrot.slane %v364, 2
        %v366 = vadd.f32 %v364, %v365
        %v367 = vrot.slane %v366, 1
        %v368 = vadd.f32 %v366, %v367
        %v369 = vsel %vm288, %v344, 0.0
        %v370 = vadd.f32 %v336, %v369
        %v371 = vrot.slane %v370, 4
        %v372 = vadd.f32 %v370, %v371
        %v373 = vrot.slane %v372, 2
        %v374 = vadd.f32 %v372, %v373
        %v375 = vrot.slane %v374, 1
        %v376 = vadd.f32 %v374, %v375
        %v377 = vlog2.pop %v352
        %v378 = vmul.f32 %v377, 0.6931472
        %v379 = vlog2.pop %v360
        %v380 = vmul.f32 %v379, 0.6931472
        %v381 = vlog2.pop %v368
        %v382 = vmul.f32 %v381, 0.6931472
        %v383 = vlog2.pop %v376
        %v384 = vmul.f32 %v383, 0.6931472
        %v385 = vlaneseq
        %v386 = vshrl.u32 %v385, 7
        %v387 = vadd.s32 %v386, 8
        %v388 = vperm.slane %v287, 0
        %v389 = vperm.slane %v287, 1
        %v390 = vperm.slane %v287, 2
        %v391 = vperm.slane %v287, 3
        %vm392 = vcmp.eq.s32.totalorder %v386, %v388
        %vm393 = vcmp.eq.s32.totalorder %v386, %v389
        %vm394 = vcmp.eq.s32.totalorder %v386, %v390
        %vm395 = vcmp.eq.s32.totalorder %v386, %v391
        %vm396 = vcmp.eq.s32.totalorder %v387, %v388
        %vm397 = vcmp.eq.s32.totalorder %v387, %v389
        %vm398 = vcmp.eq.s32.totalorder %v387, %v390
        %vm399 = vcmp.eq.s32.totalorder %v387, %v391
        %v400 = vadd.f32 %v296, %v378
        %v401 = vadd.f32 %v304, %v380
        %v402 = vadd.f32 %v312, %v382
        %v403 = vadd.f32 %v320, %v384
        %v404 = vsub.f32 %v400, %v271
        %v405 = vsub.f32 %v401, %v272
        %v406 = vsub.f32 %v402, %v273
        %v407 = vsub.f32 %v403, %v274
        %v408 = vsub.f32 %v400, %v275
        %v409 = vsub.f32 %v401, %v276
        %v410 = vsub.f32 %v402, %v277
        %v411 = vsub.f32 %v403, %v278
        %v412 = vmul.f32 %v279, %v404
        %v413 = vmul.f32 %v280, %v405
        %v414 = vmul.f32 %v281, %v406
        %v415 = vmul.f32 %v282, %v407
        %v416 = vmul.f32 %v283, %v408
        %v417 = vmul.f32 %v284, %v409
        %v418 = vmul.f32 %v285, %v410
        %v419 = vmul.f32 %v286, %v411
        %v420 = vsel %vm392, %v412, 0.0
        %v421 = vsel %vm393, %v413, 0.0
        %v422 = vsel %vm394, %v414, 0.0
        %v423 = vsel %vm395, %v415, 0.0
        %v424 = vsel %vm396, %v416, 0.0
        %v425 = vsel %vm397, %v417, 0.0
        %v426 = vsel %vm398, %v418, 0.0
        %v427 = vsel %vm399, %v419, 0.0
        %v428 = vsel %vm288, %v424, 0.0
        %v429 = vadd.f32 %v420, %v428
        %v430 = vrot.slane %v429, 4
        %v431 = vadd.f32 %v429, %v430
        %v432 = vrot.slane %v431, 2
        %v433 = vadd.f32 %v431, %v432
        %v434 = vrot.slane %v433, 1
        %v435 = vadd.f32 %v433, %v434
        %v436 = vsel %vm288, %v425, 0.0
        %v437 = vadd.f32 %v421, %v436
        %v438 = vrot.slane %v437, 4
        %v439 = vadd.f32 %v437, %v438
        %v440 = vrot.slane %v439, 2
        %v441 = vadd.f32 %v439, %v440
        %v442 = vrot.slane %v441, 1
        %v443 = vadd.f32 %v441, %v442
        %v444 = vsel %vm288, %v426, 0.0
        %v445 = vadd.f32 %v422, %v444
        %v446 = vrot.slane %v445, 4
        %v447 = vadd.f32 %v445, %v446
        %v448 = vrot.slane %v447, 2
        %v449 = vadd.f32 %v447, %v448
        %v450 = vrot.slane %v449, 1
        %v451 = vadd.f32 %v449, %v450
        %v452 = vsel %vm288, %v427, 0.0
        %v453 = vadd.f32 %v423, %v452
        %v454 = vrot.slane %v453, 4
        %v455 = vadd.f32 %v453, %v454
        %v456 = vrot.slane %v455, 2
        %v457 = vadd.f32 %v455, %v456
        %v458 = vrot.slane %v457, 1
        %v459 = vadd.f32 %v457, %v458
        %p460 = scmp.ne.s32.totalorder %s23, 4
        // Predicated region
        $region45: #{tpu_custom_call.1} parent=31 // pred_check
          %p461 = pneg %p460
        $region46: #{tpu_custom_call.1} parent=31 // pred_check_branch
          %463 = sbr.rel (%p461) target = $region48
        $region47: #{tpu_custom_call.1} parent=31 // pred_region
          %vm464 = vcmask 1040384
          %v465 = vsel %vm464, %v435, 0.0
          %v466 = vsel %vm464, %v443, 0.0
          %v467 = vadd.f32 %v465, %v466
          %v468 = vsel %vm464, %v451, 0.0
          %v469 = vadd.f32 %v467, %v468
          %v470 = vsel %vm464, %v459, 0.0
          %v471 = vadd.f32 %v469, %v470
          %472 = vadd.xlane.f32.xlu0 %v471
          %v473 = vpop.xlane.xlu0 %472
          %v474 = vrot.slane %v473, 4
          %v475 = vadd.f32 %v473, %v474
          %v476 = vrot.slane %v475, 2
          %v477 = vadd.f32 %v475, %v476
          %v478 = vrot.slane %v477, 1
          %v479 = vadd.f32 %v477, %v478
          %s480 = vtos %v479
          %v481 = vstv %s480
          %v482 = vadd.f32 %v481, 0.0
          %483 = vst [vmem:[%s267] sm:$0x1] %v482
        $region48: #{tpu_custom_call.1} parent=31 // pred_fallthru
          _
        %p484 = scmp.eq.s32.totalorder %s23, 4
        // Predicated region
        $region49: #{tpu_custom_call.1} parent=31 // pred_check
          %p485 = pneg %p484
        $region50: #{tpu_custom_call.1} parent=31 // pred_check_branch
          %487 = sbr.rel (%p485) target = $region52
        $region51: #{tpu_custom_call.1} parent=31 // pred_region
          %v488 = vlaneseq
          %v489 = vand.u32 %v488, 127
          %v490 = vadd.s32 %v489, 128
          %v491 = vadd.s32 %v489, 256
          %v492 = vadd.s32 %v489, 384
          %s493 = smul.u32 %s23, 512
          %v494 = vstv %s493
          %v495 = vadd.s32 %v489, %v494
          %v496 = vadd.s32 %v490, %v494
          %v497 = vadd.s32 %v491, %v494
          %v498 = vadd.s32 %v492, %v494
          %vm499 = vcmp.lt.s32.totalorder %v495, 2500
          %vm500 = vcmp.lt.s32.totalorder %v496, 2500
          %vm501 = vcmp.lt.s32.totalorder %v497, 2500
          %vm502 = vcmp.lt.s32.totalorder %v498, 2500
          %v503 = vsel %vm499, %v435, 0.0
          %v504 = vsel %vm500, %v443, 0.0
          %v505 = vsel %vm501, %v451, 0.0
          %v506 = vsel %vm502, %v459, 0.0
          %vm507 = vcmask 1040384
          %v508 = vsel %vm507, %v503, 0.0
          %v509 = vsel %vm507, %v504, 0.0
          %v510 = vadd.f32 %v508, %v509
          %v511 = vsel %vm507, %v505, 0.0
          %v512 = vadd.f32 %v510, %v511
          %v513 = vsel %vm507, %v506, 0.0
          %v514 = vadd.f32 %v512, %v513
          %515 = vadd.xlane.f32.xlu0 %v514
          %v516 = vpop.xlane.xlu0 %515
          %v517 = vrot.slane %v516, 4
          %v518 = vadd.f32 %v516, %v517
          %v519 = vrot.slane %v518, 2
          %v520 = vadd.f32 %v518, %v519
          %v521 = vrot.slane %v520, 1
          %v522 = vadd.f32 %v520, %v521
          %s523 = vtos %v522
          %v524 = vstv %s523
          %v525 = vadd.f32 %v524, 0.0
          %526 = vst [vmem:[%s267] sm:$0x1] %v525
        $region52: #{tpu_custom_call.1} parent=31 // pred_fallthru
          _
        %s527 = sand.u32 %s109, 1
        %s528 = scalar_lea.sflag [#allocation4], %s527
        %s529 = sand.u32 %s109, 1
        %s530 = scalar_lea.vmem [#allocation8], %s529
        // Predicated region
        $region53: #{tpu_custom_call.1} parent=31 // pred_check
          %p531 = pneg %p119
        $region54: #{tpu_custom_call.1} parent=31 // pred_check_branch
          %533 = sbr.rel (%p531) target = $region56
        $region55: #{tpu_custom_call.1} parent=31 // pred_region
          %535 = vsyncadd %s528, 0
          %s536 = scalar_lea.hbm %s3, %s23
          %s538 = sshll.u32 %s530, 4
          %s539 = int_to_ptr.vmem [resolvable:$true] %s538
          %s540 = sshll.u32 %s536, 4
          %s541 = int_to_ptr.hbm [resolvable:$true] %s540
          %543 = dma.vmem_to_hbm [thread:$0]  %s539, 16, %s541, %s528
        $region56: #{tpu_custom_call.1} parent=31 // pred_fallthru
          _
      $region32: #{tpu_custom_call.1} parent=5 // pred_fallthru
        _
      %p544 = scmp.le.s32.totalorder 2, %s18
      // Predicated region
      $region57: #{tpu_custom_call.1} parent=5 // pred_check
        %p545 = pneg %p544
      $region58: #{tpu_custom_call.1} parent=5 // pred_check_branch
        %547 = sbr.rel (%p545) target = $region60
      $region59: #{tpu_custom_call.1} parent=5 // pred_region
        %s548 = ssub.s32 %s18, 2
        // Predicated region
        $region61: #{tpu_custom_call.1} parent=59 // pred_check
          %p549 = pneg %p125
        $region62: #{tpu_custom_call.1} parent=59 // pred_check_branch
          %551 = sbr.rel (%p549) target = $region64
        $region63: #{tpu_custom_call.1} parent=59 // pred_region
          %s552 = sand.u32 %s110, 1
          %s553 = scalar_lea.sflag [#allocation4], %s552
          %s554 = sand.u32 %s110, 1
          %s555 = scalar_lea.vmem [#allocation8], %s554
          %557 = dma.done %s553, 16
        $region64: #{tpu_custom_call.1} parent=59 // pred_fallthru
          _
      $region60: #{tpu_custom_call.1} parent=5 // pred_fallthru
        _
    $region6: #{tpu_custom_call.1} parent=1 // loop_footer
      %s22 = sadd.s32 1, %s18
    $region7: #{tpu_custom_call.1} parent=1 // loop_footer_branch
      %17 = sbr.rel target = $region3
    $region8: #{tpu_custom_call.1} parent=1 // loop_exit
      _
    %558 = vsyncpa [#allocation3], 1
    %s559 = scalar_lea.sflag [#allocation3], 1
    %560 = vsyncpa %s559, 1
    %561 = vsyncpa [#allocation6], 1
    %s562 = scalar_lea.sflag [#allocation6], 1
    %563 = vsyncpa %s562, 1
    %564 = vsyncpa [#allocation4], 1
    %s565 = scalar_lea.sflag [#allocation4], 1
    %566 = vsyncpa %s565, 1

</llo_original>
